<compile_context>
chip_gen: v6e
topology: v6e:2x2x1
jax: 0.10.0
libtpu: 0.0.40
codegen_flags: <defaults>
</compile_context>

<pallas_src>
import functools

import jax
import jax.numpy as jnp
from jax.experimental import pallas as pl
from jax.experimental.pallas import tpu as pltpu


def make_positional_encodings(context_length: int, embedding_dim: int,
                              dtype=jnp.float32) -> jnp.ndarray:
    """Sinusoidal PE identical to the PyTorch __init__ loop (odd D: last col stays 0)."""
    half = embedding_dim // 2
    pos = jnp.arange(context_length, dtype=jnp.float32)[:, None]        # [S, 1]
    i = jnp.arange(half, dtype=jnp.float32)[None, :]                     # [1, D/2]
    denom = jnp.power(10000.0, 2.0 * i / embedding_dim)                  # [1, D/2]
    angles = pos / denom                                                 # [S, D/2]
    pe = jnp.zeros((context_length, embedding_dim), dtype=jnp.float32)
    pe = pe.at[:, 0:2 * half:2].set(jnp.sin(angles))
    pe = pe.at[:, 1:2 * half:2].set(jnp.cos(angles))
    # NOTE: cast once here (layer "init") to the model dtype to avoid a per-call
    # astype pass over pe in the forward wrapper.
    return pe.astype(dtype)


def _pe_add_kernel(pe_ref, x_ref, o_ref):
    # x_ref / o_ref: [tB, tR, lanes]; pe_ref: [tR, lanes].
    # Broadcast over the leading (batch) dim is free on the VPU.
    o_ref[...] = x_ref[...] + pe_ref[...]


@functools.lru_cache(maxsize=None)
def _tpu_generation_budget():
    """(target_tile_bytes, vmem_limit_bytes) derived from the chip's VMEM size."""
    try:
        vmem_cap = pltpu.get_tpu_info().vmem_capacity_bytes
    except Exception:
        vmem_cap = 64 << 20                      # conservative (v7x-sized) default
    if vmem_cap <= (64 << 20):
        # v7x: 64 MiB physical VMEM, ~3.2 TB/s HBM -> big tiles amortize the
        # ~0.35us/step cost; leave headroom under physical VMEM.
        return 8 << 20, 48 << 20
    # v5e / v6e: 128 MiB physical VMEM; ~2-4 MiB tiles are already ~85% of roofline.
    return 4 << 20, 64 << 20


def _pick_tile_rows(rows: int, gran: int, max_rows: int) -> int:
    """Largest row tile <= max_rows: full extent, else a gran-multiple divisor of
    rows (unmasked boundary), else the largest gran multiple (masked last block)."""
    if rows <= max_rows:
        return rows
    cap = max(gran, (max_rows // gran) * gran)
    t = cap
    while t >= gran:
        if rows % t == 0:
            return t
        t -= gran
    return cap


@jax.jit
def positional_encoding_forward(x: jnp.ndarray, pe: jnp.ndarray) -> jnp.ndarray:
    """x: [B, S, D]; pe: [context_length, D] with context_length >= S."""
    B, S, D = x.shape
    ctx, D_pe = pe.shape
    assert D_pe == D, "embedding_dim mismatch between x and pe"
    assert S <= ctx, "sequence length exceeds the PE buffer's context_length"

    if pe.dtype != x.dtype:
        # Single-dtype add inside the kernel. Numerics differ slightly from the
        # torch reference (f32 pe + promote) for low-precision x; fine for PEs.
        pe = pe.astype(x.dtype)

    itemsize = jnp.dtype(x.dtype).itemsize
    gran = max(8, 32 // max(1, itemsize))        # sublane granularity: 8 f32 / 16 bf16 / 32 int8
    target_tile_bytes, vmem_limit = _tpu_generation_budget()

    # ---- lane-dense layout ---------------------------------------------------
    pad_elems = 0
    if D % 128 == 0:
        lanes, rows = D, S
        x2 = x
        pe2 = pe                                  # window [0, S) via the BlockSpec
    else:
        # Flatten the per-batch [S, D] slab and pad to a (gran x 128) multiple so
        # every block is full-lane and gran-aligned (no masked partial stores).
        lanes = 128
        flat = S * D
        unit = lanes * gran
        flat_pad = ((flat + unit - 1) // unit) * unit
        pad_elems = flat_pad - flat
        rows = flat_pad // lanes
        x2 = x.reshape(B, flat)
        pe2 = pe[:S].reshape(flat)
        if pad_elems:
            x2 = jnp.pad(x2, ((0, 0), (0, pad_elems)))
            pe2 = jnp.pad(pe2, (0, pad_elems))
        x2 = x2.reshape(B, rows, lanes)
        pe2 = pe2.reshape(rows, lanes)

    # ---- tile sizes ------------------------------------------------------------
    max_tr_rows = max(gran, target_tile_bytes // (lanes * itemsize))
    tR = _pick_tile_rows(rows, gran, max_tr_rows)
    n_s = pl.cdiv(rows, tR)

    # Corner case (D % 128 == 0, S not sublane-aligned, full-extent tile): trim pe
    # so the full-extent block is legal for pe's buffer too (tiny S x D copy).
    if tR % gran != 0 and rows != pe2.shape[0]:
        pe2 = pe2[:rows]

    # Fold batches into the block while the x tile stays under budget: shrinks
    # pe's share of pipelined VMEM and cuts the number of grid steps.
    max_tb = max(1, target_tile_bytes // (tR * lanes * itemsize))
    tB = 1
    for cand in range(min(B, max_tb), 0, -1):
        if B % cand == 0:
            tB = cand
            break
    n_b = B // tB

    # Batch chunks are the innermost grid axis -> pe's block index is constant
    # across them, so its tile stays resident in VMEM (no per-batch re-DMA).
    out2 = pl.pallas_call(
        _pe_add_kernel,
        out_shape=jax.ShapeDtypeStruct((B, rows, lanes), x.dtype),
        grid_spec=pltpu.PrefetchScalarGridSpec(
            num_scalar_prefetch=0,
            grid=(n_s, n_b),
            in_specs=[
                pl.BlockSpec((tR, lanes), lambda s, b: (s, 0)),          # pe
                pl.BlockSpec((tB, tR, lanes), lambda s, b: (b, s, 0)),   # x
            ],
            out_specs=pl.BlockSpec((tB, tR, lanes), lambda s, b: (b, s, 0)),
        ),
        compiler_params=pltpu.CompilerParams(
            dimension_semantics=("parallel", "parallel"),
            vmem_limit_bytes=vmem_limit,
        ),
    )(pe2, x2)

    if D % 128 == 0:
        return out2                               # already (B, S, D)
    out_flat = out2.reshape(B, rows * lanes)
    if pad_elems:
        out_flat = out_flat[:, :S * D]
    return out_flat.reshape(B, S, D)


if __name__ == "__main__":
    # Module config (small demo): D < 128 exercises the lane-dense flatten+pad path.
    context_length = 16
    embedding_dim = 32
    B, S, D = 2, 8, embedding_dim

    key = jax.random.PRNGKey(0)
    x = jax.random.normal(key, (B, S, D), dtype=jnp.float32)
    pe = make_positional_encodings(context_length, embedding_dim)

    out = jax.block_until_ready(positional_encoding_forward(x, pe))
    ref = pe[:S][None, :, :] + x
    assert out.shape == (B, S, D)
    assert jnp.allclose(out, ref, atol=1e-6), "mismatch vs reference (f32 path)"

    # Lane-aligned path (D % 128 == 0), bf16: pe pre-cast to bf16 -> loose tolerance.
    ctx2, D2, B2, S2 = 32, 256, 2, 16
    pe_big = make_positional_encodings(ctx2, D2)
    x_big = jax.random.normal(jax.random.PRNGKey(1), (B2, S2, D2), dtype=jnp.bfloat16)
    out_big = jax.block_until_ready(positional_encoding_forward(x_big, pe_big))
    ref_big = pe_big[:S2].astype(jnp.bfloat16)[None, :, :] + x_big
    assert jnp.allclose(out_big.astype(jnp.float32), ref_big.astype(jnp.float32),
                        atol=1e-2), "mismatch vs reference (bf16 path)"

    # Awkward shapes: S not sublane-aligned, S*D not a multiple of 128 (pad + slice path).
    ctx3, D3, B3, S3 = 11, 24, 3, 7
    pe_odd = make_positional_encodings(ctx3, D3)
    x_odd = jax.random.normal(jax.random.PRNGKey(2), (B3, S3, D3), dtype=jnp.float32)
    out_odd = jax.block_until_ready(positional_encoding_forward(x_odd, pe_odd))
    ref_odd = pe_odd[:S3][None, :, :] + x_odd
    assert jnp.allclose(out_odd, ref_odd, atol=1e-6), "mismatch vs reference (padded path)"

    print("KERNEL_OK")
</pallas_src>

<mosaic_0001>
module attributes {stable_mosaic.version = 11 : i64} {
  func.func @_pe_add_kernel(%arg0: i32, %arg1: i32, %arg2: memref<8x128xf32, #tpu.memory_space<vmem>>, %arg3: memref<2x8x128xf32, #tpu.memory_space<vmem>>, %arg4: memref<2x8x128xf32, #tpu.memory_space<vmem>>) attributes {dimension_semantics = [#tpu.dimension_semantics<parallel>, #tpu.dimension_semantics<parallel>], iteration_bounds = array<i64: 1, 1>, scalar_prefetch = 0 : i64, scratch_operands = 0 : i64, tpu.core_type = #tpu.core_type<tc>, window_params = [{transform_indices = @transform_0, window_bounds = array<i64: 8, 128>}, {transform_indices = @transform_1, window_bounds = array<i64: 2, 8, 128>}, {transform_indices = @transform_2, window_bounds = array<i64: 2, 8, 128>}]} {
    %c0 = arith.constant 0 : index
    %c0_0 = arith.constant 0 : index
    %c0_1 = arith.constant 0 : index
    %0 = vector.load %arg3[%c0, %c0_0, %c0_1] : memref<2x8x128xf32, #tpu.memory_space<vmem>>, vector<2x8x128xf32>
    %c0_2 = arith.constant 0 : index
    %c0_3 = arith.constant 0 : index
    %1 = vector.load %arg2[%c0_2, %c0_3] : memref<8x128xf32, #tpu.memory_space<vmem>>, vector<8x128xf32>
    %2 = vector.shape_cast %1 : vector<8x128xf32> to vector<1x8x128xf32>
    %3 = vector.broadcast %2 : vector<1x8x128xf32> to vector<2x8x128xf32>
    %4 = arith.addf %0, %3 : vector<2x8x128xf32>
    %c0_4 = arith.constant 0 : index
    %c0_5 = arith.constant 0 : index
    %c0_6 = arith.constant 0 : index
    %5 = vector.load %arg4[%c0_4, %c0_5, %c0_6] : memref<2x8x128xf32, #tpu.memory_space<vmem>>, vector<2x8x128xf32>
    tpu.vector_store %arg4[%c0_4, %c0_5, %c0_6], %4 {strides = array<i32>} : memref<2x8x128xf32, #tpu.memory_space<vmem>>, vector<2x8x128xf32>,
    return
  }
  func.func @transform_0(%arg0: i32, %arg1: i32) -> (i32, i32) {
    %c0_i32 = arith.constant 0 : i32
    %c0_i32_0 = arith.constant 0 : i32
    return %arg0, %c0_i32 : i32, i32
  }
  func.func @transform_1(%arg0: i32, %arg1: i32) -> (i32, i32, i32) {
    %c0_i32 = arith.constant 0 : i32
    %c0_i32_0 = arith.constant 0 : i32
    return %arg1, %arg0, %c0_i32 : i32, i32, i32
  }
  func.func @transform_2(%arg0: i32, %arg1: i32) -> (i32, i32, i32) {
    %c0_i32 = arith.constant 0 : i32
    %c0_i32_0 = arith.constant 0 : i32
    return %arg1, %arg0, %c0_i32 : i32, i32, i32
  }
}

</mosaic_0001>

<llo_original>
// kernel: positional_encoding_forward.1
$region0: #{positional_encoding_forward.1}
  #allocation0 [shape = 'u32[]', space=smem, size = 0x4, offset = 0x4, fixed_abs, tag = 'smem constant byte address 0x4 - core index']
  #allocation1 [shape = 'u32[144,128]{1,0:T(1,128)}', space=vmem, size = 0x12000, scoped, tag = 'internal scratch']
  %s0 = inlined_call_operand.vmem [shape: f32[8,128], index: 0, kind: input, shape index: {}]
  %s1 = inlined_call_operand.vmem [shape: f32[2,8,128], index: 1, kind: input, shape index: {}]
  %s2 = inlined_call_operand.vmem [shape: f32[2,8,128], index: 2, kind: output, shape index: {}]
  %s3 = sld [smem:[#allocation0]]
  $region18: #{positional_encoding_forward.1} parent=0
    _
  %s5 = ssub.s32 1, %s3
  %s6 = scalar_select 0, %s5, %s3
  // Predicated region
  $region2: #{positional_encoding_forward.1} parent=0 // pred_check
    _
  $region3: #{positional_encoding_forward.1} parent=0 // pred_check_branch
    %8 = sbr.rel (0) target = $region5
  $region4: #{positional_encoding_forward.1} parent=0 // pred_region
    _
  $region5: #{positional_encoding_forward.1} parent=0 // pred_fallthru
    _
  // Predicated region
  $region6: #{positional_encoding_forward.1} parent=0 // pred_check
    _
  $region7: #{positional_encoding_forward.1} parent=0 // pred_check_branch
    %10 = sbr.rel (0) target = $region9
  $region8: #{positional_encoding_forward.1} parent=0 // pred_region
    _
  $region9: #{positional_encoding_forward.1} parent=0 // pred_fallthru
    _
  %v11 = vld [vmem:[%s1] sm:$0xff]
  %v12 = vld [vmem:[%s1 + $0x8] sm:$0xff]
  %v13 = vld [vmem:[%s0] sm:$0xff]
  %v14 = vadd.f32 %v11, %v13
  %v15 = vadd.f32 %v12, %v13
  %16 = vst [vmem:[%s2] sm:$0xff] %v14
  %17 = vst [vmem:[%s2 + $0x8] sm:$0xff] %v15
  // Predicated region
  $region10: #{positional_encoding_forward.1} parent=0 // pred_check
    _
  $region11: #{positional_encoding_forward.1} parent=0 // pred_check_branch
    %19 = sbr.rel (0) target = $region13
  $region12: #{positional_encoding_forward.1} parent=0 // pred_region
    _
  $region13: #{positional_encoding_forward.1} parent=0 // pred_fallthru
    _
  // Predicated region
  $region14: #{positional_encoding_forward.1} parent=0 // pred_check
    _
  $region15: #{positional_encoding_forward.1} parent=0 // pred_check_branch
    %21 = sbr.rel (0) target = $region17
  $region16: #{positional_encoding_forward.1} parent=0 // pred_region
    _
  $region17: #{positional_encoding_forward.1} parent=0 // pred_fallthru
    _

</llo_original>
